<compile_context>
chip_gen: v6e
topology: v6e:2x2x1
jax: 0.10.0
libtpu: 0.0.40
codegen_flags: <defaults>
</compile_context>

<pallas_src>
import jax
import jax.numpy as jnp
import numpy as np
from jax.experimental import pallas as pl
from jax.experimental.pallas import tpu as pltpu

H_PAD = 128     # hidden width 16 padded to a full lane group
W3_PAD = 128    # fc3 weight kept lane-dense for the MXU (resident, cheap)
TM_MAX = 2048   # max batch-tile rows (amortizes ~0.35 us per-grid-step cost)


def _round_up(n, m):
    return ((n + m - 1) // m) * m


def qnetwork_kernel(x_ref, w1_ref, b1_ref, w2_ref, b2_ref, w3_ref, b3_ref,
                    o_ref):
    # fc1 + ReLU  (bf16 MXU inputs, f32 accumulate, f32 elementwise)
    x = x_ref[...].astype(jnp.bfloat16)
    h1 = jnp.dot(x, w1_ref[...], preferred_element_type=jnp.float32)
    h1 = jnp.maximum(h1 + b1_ref[...], 0.0)
    # fc2 + ReLU
    h2 = jnp.dot(h1.astype(jnp.bfloat16), w2_ref[...],
                 preferred_element_type=jnp.float32)
    h2 = jnp.maximum(h2 + b2_ref[...], 0.0)
    # out (no activation). Matmul stays 128-wide; only the useful a_out lanes
    # are bias-added and stored, so HBM writeback is ~16x smaller.
    y = jnp.dot(h2.astype(jnp.bfloat16), w3_ref[...],
                preferred_element_type=jnp.float32)
    a_out = o_ref.shape[-1]
    o_ref[...] = (y[:, :a_out] + b3_ref[...]).astype(o_ref.dtype)


def _pad2(a, rows, cols):
    out = jnp.zeros((rows, cols), a.dtype)
    return out.at[:a.shape[0], :a.shape[1]].set(a)


def prepare_params(params):
    """One-time padding/cast of parameters. Call once per weight update,
    NOT per forward call (hoists wrapper-side zeros/scatter/casts)."""
    input_dim = params["w1"].shape[0]
    action_dim = params["w3"].shape[1]
    a_out = _round_up(action_dim, 8)                  # narrow output width
    w1 = _pad2(params["w1"], input_dim, H_PAD).astype(jnp.bfloat16)
    w2 = _pad2(params["w2"], H_PAD, H_PAD).astype(jnp.bfloat16)
    w3 = _pad2(params["w3"], H_PAD, W3_PAD).astype(jnp.bfloat16)
    b1 = _pad2(params["b1"], 1, H_PAD)                # biases stay f32
    b2 = _pad2(params["b2"], 1, H_PAD)
    b3 = _pad2(params["b3"], 1, a_out)
    return (w1, b1, w2, b2, w3, b3)


def qnetwork_forward(x, padded_params, *, action_dim, tm_max=TM_MAX):
    """x: (B, input_dim) f32. padded_params: output of prepare_params()."""
    w1, b1, w2, b2, w3, b3 = padded_params
    B, input_dim = x.shape
    a_out = b3.shape[1]

    # Balanced batch tiles: minimize padding instead of rounding B up to tm.
    n_tiles = -(-B // tm_max)
    tm = _round_up(-(-B // n_tiles), 16)   # multiple of 16 (bf16 sublane pack)
    b_pad = n_tiles * tm
    x_pad = x if b_pad == B else jnp.pad(x, ((0, b_pad - B), (0, 0)))

    out = pl.pallas_call(
        qnetwork_kernel,
        out_shape=jax.ShapeDtypeStruct((b_pad, a_out), jnp.float32),
        grid_spec=pltpu.PrefetchScalarGridSpec(
            num_scalar_prefetch=0,
            grid=(n_tiles,),
            in_specs=[
                pl.BlockSpec((tm, input_dim), lambda i: (i, 0)),     # x (tiled)
                pl.BlockSpec((input_dim, H_PAD), lambda i: (0, 0)),  # w1 (resident)
                pl.BlockSpec((1, H_PAD), lambda i: (0, 0)),          # b1
                pl.BlockSpec((H_PAD, H_PAD), lambda i: (0, 0)),      # w2
                pl.BlockSpec((1, H_PAD), lambda i: (0, 0)),          # b2
                pl.BlockSpec((H_PAD, W3_PAD), lambda i: (0, 0)),     # w3
                pl.BlockSpec((1, a_out), lambda i: (0, 0)),          # b3
            ],
            out_specs=pl.BlockSpec((tm, a_out), lambda i: (i, 0)),   # narrow out
        ),
        compiler_params=pltpu.CompilerParams(
            dimension_semantics=("parallel",),   # shard batch tiles across TCs
            vmem_limit_bytes=32 * 1024 * 1024,   # headroom for tm=2048 on v5e
        ),
    )(x_pad, w1, b1, w2, b2, w3, b3)

    return out[:B, :action_dim]


def init_params(key, input_dim, action_dim, hidden=16):
    """nn.Linear-style init: U(-1/sqrt(fan_in), +1/sqrt(fan_in)); (in,out) layout."""
    def linear(k, fan_in, fan_out):
        kw, kb = jax.random.split(k)
        bound = 1.0 / np.sqrt(fan_in)
        w = jax.random.uniform(kw, (fan_in, fan_out), jnp.float32,
                               minval=-bound, maxval=bound)
        b = jax.random.uniform(kb, (1, fan_out), jnp.float32,
                               minval=-bound, maxval=bound)
        return w, b

    k1, k2, k3 = jax.random.split(key, 3)
    w1, b1 = linear(k1, input_dim, hidden)
    w2, b2 = linear(k2, hidden, hidden)
    w3, b3 = linear(k3, hidden, action_dim)
    return {"w1": w1, "b1": b1, "w2": w2, "b2": b2, "w3": w3, "b3": b3}


def qnetwork_ref_bf16(x, params):
    """Pure-JAX reference with the SAME bf16-input / f32-accumulate math."""
    w1, b1, w2, b2, w3, b3 = prepare_params(params)
    h = jnp.dot(x.astype(jnp.bfloat16), w1, preferred_element_type=jnp.float32)
    h = jnp.maximum(h + b1, 0.0)
    h = jnp.dot(h.astype(jnp.bfloat16), w2, preferred_element_type=jnp.float32)
    h = jnp.maximum(h + b2, 0.0)
    y = jnp.dot(h.astype(jnp.bfloat16), w3, preferred_element_type=jnp.float32)
    y = y[:, :b3.shape[1]] + b3
    return y[:, :params["w3"].shape[1]]


def qnetwork_ref_f32(x, params):
    """Full-precision PyTorch-semantics reference."""
    h = jnp.maximum(x @ params["w1"] + params["b1"], 0.0)
    h = jnp.maximum(h @ params["w2"] + params["b2"], 0.0)
    return h @ params["w3"] + params["b3"]


if __name__ == "__main__":
    key = jax.random.PRNGKey(0)
    k_x, k_p = jax.random.split(key)

    batch = 8
    input_dim = 4      # CartPole-style observation dim
    action_dim = 2

    x = jax.random.normal(k_x, (batch, input_dim), jnp.float32)
    params = init_params(k_p, input_dim, action_dim)

    # Pad/cast params ONCE; jit the forward (tm / action_dim are static).
    padded = prepare_params(params)
    fwd = jax.jit(qnetwork_forward, static_argnames=("action_dim", "tm_max"))

    out = fwd(x, padded, action_dim=action_dim)
    out = jax.block_until_ready(out)

    # Exact-math check (same bf16-input / f32-accumulate path).
    # TODO(synk): matmuls could run in f32 at ~zero cost (MXU is idle) if exact
    # PyTorch/target-network parity is required.
    ref_bf16 = qnetwork_ref_bf16(x, params)
    np.testing.assert_allclose(np.asarray(out), np.asarray(ref_bf16),
                               rtol=1e-3, atol=1e-3)
    # Semantics check vs full-f32 PyTorch-equivalent forward (bf16 tolerance).
    ref_f32 = qnetwork_ref_f32(x, params)
    np.testing.assert_allclose(np.asarray(out), np.asarray(ref_f32),
                               rtol=1e-1, atol=1e-1)

    print("KERNEL_OK")
</pallas_src>

<mosaic_0001>
module attributes {stable_mosaic.version = 11 : i64} {
  func.func @qnetwork_kernel(%arg0: i32, %arg1: memref<16x4xf32, #tpu.memory_space<vmem>>, %arg2: memref<4x128xbf16, #tpu.memory_space<vmem>>, %arg3: memref<1x128xf32, #tpu.memory_space<vmem>>, %arg4: memref<128x128xbf16, #tpu.memory_space<vmem>>, %arg5: memref<1x128xf32, #tpu.memory_space<vmem>>, %arg6: memref<128x128xbf16, #tpu.memory_space<vmem>>, %arg7: memref<1x8xf32, #tpu.memory_space<vmem>>, %arg8: memref<16x8xf32, #tpu.memory_space<vmem>>) attributes {dimension_semantics = [#tpu.dimension_semantics<parallel>], iteration_bounds = array<i64: 1>, scalar_prefetch = 0 : i64, scratch_operands = 0 : i64, tpu.core_type = #tpu.core_type<tc>, window_params = [{transform_indices = @transform_0, window_bounds = array<i64: 16, 4>}, {pipeline_mode = #tpu.pipeline_mode<synchronous>, transform_indices = @transform_1, window_bounds = array<i64: 4, 128>}, {pipeline_mode = #tpu.pipeline_mode<synchronous>, transform_indices = @transform_2, window_bounds = array<i64: 1, 128>}, {pipeline_mode = #tpu.pipeline_mode<synchronous>, transform_indices = @transform_3, window_bounds = array<i64: 128, 128>}, {pipeline_mode = #tpu.pipeline_mode<synchronous>, transform_indices = @transform_4, window_bounds = array<i64: 1, 128>}, {pipeline_mode = #tpu.pipeline_mode<synchronous>, transform_indices = @transform_5, window_bounds = array<i64: 128, 128>}, {pipeline_mode = #tpu.pipeline_mode<synchronous>, transform_indices = @transform_6, window_bounds = array<i64: 1, 8>}, {transform_indices = @transform_7, window_bounds = array<i64: 16, 8>}]} {
    %c0 = arith.constant 0 : index
    %c0_0 = arith.constant 0 : index
    %0 = vector.load %arg1[%c0, %c0_0] : memref<16x4xf32, #tpu.memory_space<vmem>>, vector<16x4xf32>
    %1 = arith.truncf %0 : vector<16x4xf32> to vector<16x4xbf16>
    %c0_1 = arith.constant 0 : index
    %c0_2 = arith.constant 0 : index
    %2 = vector.load %arg2[%c0_1, %c0_2] : memref<4x128xbf16, #tpu.memory_space<vmem>>, vector<4x128xbf16>
    %cst = arith.constant dense<0.000000e+00> : vector<16x128xf32>
    %3 = tpu.matmul %1, %2, %cst {dimension_numbers = #tpu.dot_dimension_numbers<[1], [0], [0], [1], [0, 0, 1, 1], [], []>} : vector<16x4xbf16>, vector<4x128xbf16>, vector<16x128xf32> -> vector<16x128xf32>
    %c0_3 = arith.constant 0 : index
    %c0_4 = arith.constant 0 : index
    %4 = vector.load %arg3[%c0_3, %c0_4] : memref<1x128xf32, #tpu.memory_space<vmem>>, vector<1x128xf32>
    %5 = vector.broadcast %4 : vector<1x128xf32> to vector<16x128xf32>
    %6 = arith.addf %3, %5 : vector<16x128xf32>
    %cst_5 = arith.constant 0.000000e+00 : f32
    %7 = vector.broadcast %cst_5 : f32 to vector<16x128xf32>
    %8 = arith.maximumf %6, %7 : vector<16x128xf32>
    %9 = arith.truncf %8 : vector<16x128xf32> to vector<16x128xbf16>
    %c0_6 = arith.constant 0 : index
    %c0_7 = arith.constant 0 : index
    %10 = vector.load %arg4[%c0_6, %c0_7] : memref<128x128xbf16, #tpu.memory_space<vmem>>, vector<128x128xbf16>
    %cst_8 = arith.constant dense<0.000000e+00> : vector<16x128xf32>
    %11 = tpu.matmul %9, %10, %cst_8 {dimension_numbers = #tpu.dot_dimension_numbers<[1], [0], [0], [1], [0, 0, 1, 1], [], []>} : vector<16x128xbf16>, vector<128x128xbf16>, vector<16x128xf32> -> vector<16x128xf32>
    %c0_9 = arith.constant 0 : index
    %c0_10 = arith.constant 0 : index
    %12 = vector.load %arg5[%c0_9, %c0_10] : memref<1x128xf32, #tpu.memory_space<vmem>>, vector<1x128xf32>
    %13 = vector.broadcast %12 : vector<1x128xf32> to vector<16x128xf32>
    %14 = arith.addf %11, %13 : vector<16x128xf32>
    %cst_11 = arith.constant 0.000000e+00 : f32
    %15 = vector.broadcast %cst_11 : f32 to vector<16x128xf32>
    %16 = arith.maximumf %14, %15 : vector<16x128xf32>
    %17 = arith.truncf %16 : vector<16x128xf32> to vector<16x128xbf16>
    %c0_12 = arith.constant 0 : index
    %c0_13 = arith.constant 0 : index
    %18 = vector.load %arg6[%c0_12, %c0_13] : memref<128x128xbf16, #tpu.memory_space<vmem>>, vector<128x128xbf16>
    %cst_14 = arith.constant dense<0.000000e+00> : vector<16x128xf32>
    %19 = tpu.matmul %17, %18, %cst_14 {dimension_numbers = #tpu.dot_dimension_numbers<[1], [0], [0], [1], [0, 0, 1, 1], [], []>} : vector<16x128xbf16>, vector<128x128xbf16>, vector<16x128xf32> -> vector<16x128xf32>
    %20 = vector.extract_strided_slice %19 {offsets = [0, 0], sizes = [16, 8], strides = [1, 1]} : vector<16x128xf32> to vector<16x8xf32>
    %c0_15 = arith.constant 0 : index
    %c0_16 = arith.constant 0 : index
    %21 = vector.load %arg7[%c0_15, %c0_16] : memref<1x8xf32, #tpu.memory_space<vmem>>, vector<1x8xf32>
    %22 = vector.broadcast %21 : vector<1x8xf32> to vector<16x8xf32>
    %23 = arith.addf %20, %22 : vector<16x8xf32>
    %c0_17 = arith.constant 0 : index
    %c0_18 = arith.constant 0 : index
    %24 = vector.load %arg8[%c0_17, %c0_18] : memref<16x8xf32, #tpu.memory_space<vmem>>, vector<16x8xf32>
    tpu.vector_store %arg8[%c0_17, %c0_18], %23 {strides = array<i32>} : memref<16x8xf32, #tpu.memory_space<vmem>>, vector<16x8xf32>,
    return
  }
  func.func @transform_0(%arg0: i32) -> (i32, i32) {
    %c0_i32 = arith.constant 0 : i32
    %c0_i32_0 = arith.constant 0 : i32
    return %arg0, %c0_i32 : i32, i32
  }
  func.func @transform_1(%arg0: i32) -> (i32, i32) {
    %c0_i32 = arith.constant 0 : i32
    %c0_i32_0 = arith.constant 0 : i32
    %c0_i32_1 = arith.constant 0 : i32
    return %c0_i32, %c0_i32_0 : i32, i32
  }
  func.func @transform_2(%arg0: i32) -> (i32, i32) {
    %c0_i32 = arith.constant 0 : i32
    %c0_i32_0 = arith.constant 0 : i32
    %c0_i32_1 = arith.constant 0 : i32
    return %c0_i32, %c0_i32_0 : i32, i32
  }
  func.func @transform_3(%arg0: i32) -> (i32, i32) {
    %c0_i32 = arith.constant 0 : i32
    %c0_i32_0 = arith.constant 0 : i32
    %c0_i32_1 = arith.constant 0 : i32
    return %c0_i32, %c0_i32_0 : i32, i32
  }
  func.func @transform_4(%arg0: i32) -> (i32, i32) {
    %c0_i32 = arith.constant 0 : i32
    %c0_i32_0 = arith.constant 0 : i32
    %c0_i32_1 = arith.constant 0 : i32
    return %c0_i32, %c0_i32_0 : i32, i32
  }
  func.func @transform_5(%arg0: i32) -> (i32, i32) {
    %c0_i32 = arith.constant 0 : i32
    %c0_i32_0 = arith.constant 0 : i32
    %c0_i32_1 = arith.constant 0 : i32
    return %c0_i32, %c0_i32_0 : i32, i32
  }
  func.func @transform_6(%arg0: i32) -> (i32, i32) {
    %c0_i32 = arith.constant 0 : i32
    %c0_i32_0 = arith.constant 0 : i32
    %c0_i32_1 = arith.constant 0 : i32
    return %c0_i32, %c0_i32_0 : i32, i32
  }
  func.func @transform_7(%arg0: i32) -> (i32, i32) {
    %c0_i32 = arith.constant 0 : i32
    %c0_i32_0 = arith.constant 0 : i32
    return %arg0, %c0_i32 : i32, i32
  }
}

</mosaic_0001>

<llo_original>
// kernel: qnetwork_forward.1
$region0: #{qnetwork_forward.1}
  #allocation0 [shape = 'u32[]', space=smem, size = 0x4, offset = 0x4, fixed_abs, tag = 'smem constant byte address 0x4 - core index']
  #allocation1 [shape = 'u32[144,128]{1,0:T(1,128)}', space=vmem, size = 0x12000, scoped, tag = 'internal scratch']
  %s0 = inlined_call_operand.vmem [shape: f32[16,4], index: 0, kind: input, shape index: {}]
  %s1 = inlined_call_operand.vmem [shape: bf16[4,128], index: 1, kind: input, shape index: {}]
  %s2 = inlined_call_operand.vmem [shape: f32[1,128], index: 2, kind: input, shape index: {}]
  %s3 = inlined_call_operand.hbm [shape: bf16[128,128], index: 3, kind: input, shape index: {}]
  %s4 = inlined_call_operand.vmem [shape: f32[1,128], index: 4, kind: input, shape index: {}]
  %s5 = inlined_call_operand.hbm [shape: bf16[128,128], index: 5, kind: input, shape index: {}]
  %s6 = inlined_call_operand.vmem [shape: f32[1,8], index: 6, kind: input, shape index: {}]
  %s7 = inlined_call_operand.vmem [shape: f32[16,8], index: 7, kind: output, shape index: {}]
  %s8 = sld [smem:[#allocation0]]
  $region46: #{qnetwork_forward.1} parent=0
    _
  %s10 = ssub.s32 1, %s8
  %s11 = scalar_select 0, %s10, %s8
  $region1: #{qnetwork_forward.1} parent=0
    #allocation2 [shape = 'u8[32768]{0}', space=vmem, size = 0x8000, scoped, tag = 'input window, operand 3, single buffered']
    #allocation3 [shape = 's32[1]{0}', space=sflag, size = 0x4, scoped, tag = 'scoped memory for qnetwork_forward.1']
    #allocation4 [shape = 'u8[32768]{0}', space=vmem, size = 0x8000, scoped, tag = 'input window, operand 5, single buffered']
    #allocation5 [shape = 's32[1]{0}', space=sflag, size = 0x4, scoped, tag = 'scoped memory for qnetwork_forward.1']
    %12 = vsyncpa [#allocation3], 0
    %13 = vsyncpa [#allocation5], 0
    // Predicated region
    $region2: #{qnetwork_forward.1} parent=1 // pred_check
      _
    $region3: #{qnetwork_forward.1} parent=1 // pred_check_branch
      %15 = sbr.rel (0) target = $region5
    $region4: #{qnetwork_forward.1} parent=1 // pred_region
      _
    $region5: #{qnetwork_forward.1} parent=1 // pred_fallthru
      _
    // Predicated region
    $region6: #{qnetwork_forward.1} parent=1 // pred_check
      _
    $region7: #{qnetwork_forward.1} parent=1 // pred_check_branch
      %17 = sbr.rel (0) target = $region9
    $region8: #{qnetwork_forward.1} parent=1 // pred_region
      _
    $region9: #{qnetwork_forward.1} parent=1 // pred_fallthru
      _
    // Predicated region
    $region10: #{qnetwork_forward.1} parent=1 // pred_check
      _
    $region11: #{qnetwork_forward.1} parent=1 // pred_check_branch
      %19 = sbr.rel (0) target = $region13
    $region12: #{qnetwork_forward.1} parent=1 // pred_region
      _
    $region13: #{qnetwork_forward.1} parent=1 // pred_fallthru
      _
    // Predicated region
    $region14: #{qnetwork_forward.1} parent=1 // pred_check
      _
    $region15: #{qnetwork_forward.1} parent=1 // pred_check_branch
      %21 = sbr.rel (0) target = $region17
    $region16: #{qnetwork_forward.1} parent=1 // pred_region
      %s23 = ssub.s32 1024, 1024
      %24 = vsyncadd [#allocation3], %s23
      %s25 = sshll.u32 [#allocation2], 4
      %s26 = int_to_ptr.vmem [resolvable:$true] %s25
      %31 = dma.hbm_to_vmem [thread:$0]  %s3, 1024, %s26, [#allocation3], 64, 64, 4
    $region17: #{qnetwork_forward.1} parent=1 // pred_fallthru
      _
    // Predicated region
    $region18: #{qnetwork_forward.1} parent=1 // pred_check
      _
    $region19: #{qnetwork_forward.1} parent=1 // pred_check_branch
      %33 = sbr.rel (0) target = $region21
    $region20: #{qnetwork_forward.1} parent=1 // pred_region
      _
    $region21: #{qnetwork_forward.1} parent=1 // pred_fallthru
      _
    // Predicated region
    $region22: #{qnetwork_forward.1} parent=1 // pred_check
      _
    $region23: #{qnetwork_forward.1} parent=1 // pred_check_branch
      %35 = sbr.rel (0) target = $region25
    $region24: #{qnetwork_forward.1} parent=1 // pred_region
      %s37 = ssub.s32 1024, 1024
      %38 = vsyncadd [#allocation5], %s37
      %s39 = sshll.u32 [#allocation4], 4
      %s40 = int_to_ptr.vmem [resolvable:$true] %s39
      %45 = dma.hbm_to_vmem [thread:$0]  %s5, 1024, %s40, [#allocation5], 64, 64, 4
    $region25: #{qnetwork_forward.1} parent=1 // pred_fallthru
      _
    // Predicated region
    $region26: #{qnetwork_forward.1} parent=1 // pred_check
      _
    $region27: #{qnetwork_forward.1} parent=1 // pred_check_branch
      %47 = sbr.rel (0) target = $region29
    $region28: #{qnetwork_forward.1} parent=1 // pred_region
      _
    $region29: #{qnetwork_forward.1} parent=1 // pred_fallthru
      _
    // Predicated region
    $region30: #{qnetwork_forward.1} parent=1 // pred_check
      _
    $region31: #{qnetwork_forward.1} parent=1 // pred_check_branch
      %49 = sbr.rel (0) target = $region33
    $region32: #{qnetwork_forward.1} parent=1 // pred_region
      %50 = dma.done [#allocation3], 1024
    $region33: #{qnetwork_forward.1} parent=1 // pred_fallthru
      _
    // Predicated region
    $region34: #{qnetwork_forward.1} parent=1 // pred_check
      _
    $region35: #{qnetwork_forward.1} parent=1 // pred_check_branch
      %52 = sbr.rel (0) target = $region37
    $region36: #{qnetwork_forward.1} parent=1 // pred_region
      %53 = dma.done [#allocation5], 1024
    $region37: #{qnetwork_forward.1} parent=1 // pred_fallthru
      _
    %v55 = vld [vmem:[%s0] sm:$0xff]
    %v56 = vld [vmem:[%s0 + $0x8] sm:$0xff]
    %v57 = vpack.c.bf16 %v56, %v55
    %v58 = vld [vmem:[%s1] sm:$0x3]
    %v59 = vld [vmem:[%s2] sm:$0x1]
    %v61 = vlaneseq
    %v62 = vshrl.u32 %v61, 7
    %v63 = vsub.s32 0, %v62
    %v64 = vrot.slane %v59, %v63
    %vm66 = vcmask 31744
    %v68 = vsel %vm66, %v57, 0
    %vm70 = vcmask 1041408
    %v72 = vsel %vm70, %v58, 0
    %74 = vmatprep.subr.bf16.mxu0 0
    %75 = vmatpush1.bf16.msra.mxu0 0
    %76 = vmatprep.subr.bf16.mxu0 0
    %77 = vmatpush1.bf16.msra.mxu0 0
    %78 = vmatprep.subr.bf16.mxu0 0
    %79 = vmatpush1.bf16.msra.mxu0 0
    %80 = vmatprep.subr.bf16.mxu0 0
    %81 = vmatpush1.bf16.msra.mxu0 0
    %82 = vmatprep.subr.bf16.mxu0 0
    %83 = vmatpush1.bf16.msra.mxu0 0
    %84 = vmatprep.subr.bf16.mxu0 0
    %85 = vmatpush1.bf16.msra.mxu0 0
    %86 = vmatprep.subr.bf16.mxu0 0
    %87 = vmatpush1.bf16.msra.mxu0 0
    %88 = vmatprep.subr.bf16.mxu0 0
    %89 = vmatpush1.bf16.msra.mxu0 %v72
    %90 = vmatprep.subr.bf16.mxu0 0
    %91 = vmatpush2.bf16.msra.mxu0 0
    %92 = vmatprep.subr.bf16.mxu0 0
    %93 = vmatpush2.bf16.msra.mxu0 0
    %94 = vmatprep.subr.bf16.mxu0 0
    %95 = vmatpush2.bf16.msra.mxu0 0
    %96 = vmatprep.subr.bf16.mxu0 0
    %97 = vmatpush2.bf16.msra.mxu0 0
    %98 = vmatprep.subr.bf16.mxu0 0
    %99 = vmatpush2.bf16.msra.mxu0 0
    %100 = vmatprep.subr.bf16.mxu0 0
    %101 = vmatpush2.bf16.msra.mxu0 0
    %102 = vmatprep.subr.bf16.mxu0 0
    %103 = vmatpush2.bf16.msra.mxu0 0
    %104 = vmatprep.subr.bf16.mxu0 0
    %105 = vmatpush2.bf16.msra.mxu0 0
    %106 = vmatprep.mubr.bf16.mxu0 0
    %107 = vmatmul.mubr.bf16.gmra.mxu0 %v68
    %v108 = vpop.f32.mrf.mxu0
    %v109 = vadd.f32 %v64, %v108
    %v110 = vpop.f32.mrf.mxu0
    %v111 = vpop.f32.mrf.mxu0
    %v112 = vadd.f32 %v64, %v111
    %v113 = vpop.f32.mrf.mxu0
    %114 = vdwg.mxu0
    %v115 = vmax.f32 %v109, 0.0
    %v116 = vmax.f32 %v112, 0.0
    %v117 = vpack.c.bf16 %v116, %v115
    %v118 = vld [vmem:[#allocation2] sm:$0xf]
    %v119 = vld [vmem:[#allocation2 + $0x4] sm:$0xf]
    %v120 = vld [vmem:[#allocation2 + $0x8] sm:$0xf]
    %v121 = vld [vmem:[#allocation2 + $0xc] sm:$0xf]
    %v122 = vld [vmem:[#allocation2 + $0x10] sm:$0xf]
    %v123 = vld [vmem:[#allocation2 + $0x14] sm:$0xf]
    %v124 = vld [vmem:[#allocation2 + $0x18] sm:$0xf]
    %v125 = vld [vmem:[#allocation2 + $0x1c] sm:$0xf]
    %v126 = vld [vmem:[#allocation2 + $0x20] sm:$0xf]
    %v127 = vld [vmem:[#allocation2 + $0x24] sm:$0xf]
    %v128 = vld [vmem:[#allocation2 + $0x28] sm:$0xf]
    %v129 = vld [vmem:[#allocation2 + $0x2c] sm:$0xf]
    %v130 = vld [vmem:[#allocation2 + $0x30] sm:$0xf]
    %v131 = vld [vmem:[#allocation2 + $0x34] sm:$0xf]
    %v132 = vld [vmem:[#allocation2 + $0x38] sm:$0xf]
    %v133 = vld [vmem:[#allocation2 + $0x3c] sm:$0xf]
    %v134 = vld [vmem:[%s4] sm:$0x1]
    %v136 = vlaneseq
    %v137 = vshrl.u32 %v136, 7
    %v138 = vsub.s32 0, %v137
    %v139 = vrot.slane %v134, %v138
    %v157 = vunpack.c.l.b16 %v118
    %v158 = vunpack.c.l.b16 %v119
    %v159 = vunpack.c.l.b16 %v120
    %v160 = vunpack.c.l.b16 %v121
    %v161 = vunpack.c.l.b16 %v122
    %v162 = vunpack.c.l.b16 %v123
    %v163 = vunpack.c.l.b16 %v124
    %v164 = vunpack.c.l.b16 %v125
    %v165 = vunpack.c.l.b16 %v126
    %v166 = vunpack.c.l.b16 %v127
    %v167 = vunpack.c.l.b16 %v128
    %v168 = vunpack.c.l.b16 %v129
    %v169 = vunpack.c.l.b16 %v130
    %v170 = vunpack.c.l.b16 %v131
    %v171 = vunpack.c.l.b16 %v132
    %v172 = vunpack.c.l.b16 %v133
    %v173 = vpack.c.b16 %v158, %v157
    %v174 = vpack.c.b16 %v160, %v159
    %v175 = vpack.c.b16 %v162, %v161
    %v176 = vpack.c.b16 %v164, %v163
    %v177 = vpack.c.b16 %v166, %v165
    %v178 = vpack.c.b16 %v168, %v167
    %v179 = vpack.c.b16 %v170, %v169
    %v180 = vpack.c.b16 %v172, %v171
    %189 = vmatprep.subr.bf16.mxu0 0
    %190 = vmatpush1.bf16.msra.mxu0 %v180
    %191 = vmatprep.subr.bf16.mxu0 0
    %192 = vmatpush1.bf16.msra.mxu0 %v179
    %193 = vmatprep.subr.bf16.mxu0 0
    %194 = vmatpush1.bf16.msra.mxu0 %v178
    %195 = vmatprep.subr.bf16.mxu0 0
    %196 = vmatpush1.bf16.msra.mxu0 %v177
    %197 = vmatprep.subr.bf16.mxu0 0
    %198 = vmatpush1.bf16.msra.mxu0 %v176
    %199 = vmatprep.subr.bf16.mxu0 0
    %200 = vmatpush1.bf16.msra.mxu0 %v175
    %201 = vmatprep.subr.bf16.mxu0 0
    %202 = vmatpush1.bf16.msra.mxu0 %v174
    %203 = vmatprep.subr.bf16.mxu0 0
    %204 = vmatpush1.bf16.msra.mxu0 %v173
    %205 = vmatprep.subr.bf16.mxu0 0
    %206 = vmatpush2.bf16.msra.mxu0 0
    %207 = vmatprep.subr.bf16.mxu0 0
    %208 = vmatpush2.bf16.msra.mxu0 0
    %209 = vmatprep.subr.bf16.mxu0 0
    %210 = vmatpush2.bf16.msra.mxu0 0
    %211 = vmatprep.subr.bf16.mxu0 0
    %212 = vmatpush2.bf16.msra.mxu0 0
    %213 = vmatprep.subr.bf16.mxu0 0
    %214 = vmatpush2.bf16.msra.mxu0 0
    %215 = vmatprep.subr.bf16.mxu0 0
    %216 = vmatpush2.bf16.msra.mxu0 0
    %217 = vmatprep.subr.bf16.mxu0 0
    %218 = vmatpush2.bf16.msra.mxu0 0
    %219 = vmatprep.subr.bf16.mxu0 0
    %220 = vmatpush2.bf16.msra.mxu0 0
    %221 = vmatprep.mubr.bf16.mxu0 0
    %222 = vmatmul.mubr.bf16.gmra.mxu0 %v117
    %v223 = vpop.f32.mrf.mxu0
    %v224 = vadd.f32 %v139, %v223
    %v225 = vpop.f32.mrf.mxu0
    %v226 = vpop.f32.mrf.mxu0
    %v227 = vadd.f32 %v139, %v226
    %v228 = vpop.f32.mrf.mxu0
    %229 = vdwg.mxu0
    %v230 = vmax.f32 %v224, 0.0
    %v231 = vmax.f32 %v227, 0.0
    %v232 = vpack.c.bf16 %v231, %v230
    %v233 = vld [vmem:[#allocation4] sm:$0xf]
    %v234 = vld [vmem:[#allocation4 + $0x4] sm:$0xf]
    %v235 = vld [vmem:[#allocation4 + $0x8] sm:$0xf]
    %v236 = vld [vmem:[#allocation4 + $0xc] sm:$0xf]
    %v237 = vld [vmem:[#allocation4 + $0x10] sm:$0xf]
    %v238 = vld [vmem:[#allocation4 + $0x14] sm:$0xf]
    %v239 = vld [vmem:[#allocation4 + $0x18] sm:$0xf]
    %v240 = vld [vmem:[#allocation4 + $0x1c] sm:$0xf]
    %v241 = vld [vmem:[#allocation4 + $0x20] sm:$0xf]
    %v242 = vld [vmem:[#allocation4 + $0x24] sm:$0xf]
    %v243 = vld [vmem:[#allocation4 + $0x28] sm:$0xf]
    %v244 = vld [vmem:[#allocation4 + $0x2c] sm:$0xf]
    %v245 = vld [vmem:[#allocation4 + $0x30] sm:$0xf]
    %v246 = vld [vmem:[#allocation4 + $0x34] sm:$0xf]
    %v247 = vld [vmem:[#allocation4 + $0x38] sm:$0xf]
    %v248 = vld [vmem:[#allocation4 + $0x3c] sm:$0xf]
    %v265 = vunpack.c.l.b16 %v233
    %v266 = vunpack.c.l.b16 %v234
    %v267 = vunpack.c.l.b16 %v235
    %v268 = vunpack.c.l.b16 %v236
    %v269 = vunpack.c.l.b16 %v237
    %v270 = vunpack.c.l.b16 %v238
    %v271 = vunpack.c.l.b16 %v239
    %v272 = vunpack.c.l.b16 %v240
    %v273 = vunpack.c.l.b16 %v241
    %v274 = vunpack.c.l.b16 %v242
    %v275 = vunpack.c.l.b16 %v243
    %v276 = vunpack.c.l.b16 %v244
    %v277 = vunpack.c.l.b16 %v245
    %v278 = vunpack.c.l.b16 %v246
    %v279 = vunpack.c.l.b16 %v247
    %v280 = vunpack.c.l.b16 %v248
    %v281 = vpack.c.b16 %v266, %v265
    %v282 = vpack.c.b16 %v268, %v267
    %v283 = vpack.c.b16 %v270, %v269
    %v284 = vpack.c.b16 %v272, %v271
    %v285 = vpack.c.b16 %v274, %v273
    %v286 = vpack.c.b16 %v276, %v275
    %v287 = vpack.c.b16 %v278, %v277
    %v288 = vpack.c.b16 %v280, %v279
    %297 = vmatprep.subr.bf16.mxu0 0
    %298 = vmatpush1.bf16.msra.mxu0 %v288
    %299 = vmatprep.subr.bf16.mxu0 0
    %300 = vmatpush1.bf16.msra.mxu0 %v287
    %301 = vmatprep.subr.bf16.mxu0 0
    %302 = vmatpush1.bf16.msra.mxu0 %v286
    %303 = vmatprep.subr.bf16.mxu0 0
    %304 = vmatpush1.bf16.msra.mxu0 %v285
    %305 = vmatprep.subr.bf16.mxu0 0
    %306 = vmatpush1.bf16.msra.mxu0 %v284
    %307 = vmatprep.subr.bf16.mxu0 0
    %308 = vmatpush1.bf16.msra.mxu0 %v283
    %309 = vmatprep.subr.bf16.mxu0 0
    %310 = vmatpush1.bf16.msra.mxu0 %v282
    %311 = vmatprep.subr.bf16.mxu0 0
    %312 = vmatpush1.bf16.msra.mxu0 %v281
    %313 = vmatprep.subr.bf16.mxu0 0
    %314 = vmatpush2.bf16.msra.mxu0 0
    %315 = vmatprep.subr.bf16.mxu0 0
    %316 = vmatpush2.bf16.msra.mxu0 0
    %317 = vmatprep.subr.bf16.mxu0 0
    %318 = vmatpush2.bf16.msra.mxu0 0
    %319 = vmatprep.subr.bf16.mxu0 0
    %320 = vmatpush2.bf16.msra.mxu0 0
    %321 = vmatprep.subr.bf16.mxu0 0
    %322 = vmatpush2.bf16.msra.mxu0 0
    %323 = vmatprep.subr.bf16.mxu0 0
    %324 = vmatpush2.bf16.msra.mxu0 0
    %325 = vmatprep.subr.bf16.mxu0 0
    %326 = vmatpush2.bf16.msra.mxu0 0
    %327 = vmatprep.subr.bf16.mxu0 0
    %328 = vmatpush2.bf16.msra.mxu0 0
    %329 = vmatprep.mubr.bf16.mxu0 0
    %330 = vmatmul.mubr.bf16.gmra.mxu0 %v232
    %v331 = vpop.f32.mrf.mxu0
    %v332 = vadd.f32 0.0, %v331
    %v333 = vpop.f32.mrf.mxu0
    %v334 = vpop.f32.mrf.mxu0
    %v335 = vadd.f32 0.0, %v334
    %v336 = vpop.f32.mrf.mxu0
    %337 = vdwg.mxu0
    %v338 = vld [vmem:[%s6] sm:$0x1]
    %v340 = vlaneseq
    %v341 = vshrl.u32 %v340, 7
    %v342 = vsub.s32 0, %v341
    %v343 = vrot.slane %v338, %v342
    %v345 = vadd.f32 %v332, %v343
    %v346 = vadd.f32 %v335, %v343
    %vm347 = vcmask 64512
    %348 = vst.msk [vmem:[%s7] sm:$0xff] %vm347, %v345
    %349 = vst.msk [vmem:[%s7 + $0x8] sm:$0xff] %vm347, %v346
    // Predicated region
    $region38: #{qnetwork_forward.1} parent=1 // pred_check
      _
    $region39: #{qnetwork_forward.1} parent=1 // pred_check_branch
      %351 = sbr.rel (0) target = $region41
    $region40: #{qnetwork_forward.1} parent=1 // pred_region
      _
    $region41: #{qnetwork_forward.1} parent=1 // pred_fallthru
      _
    // Predicated region
    $region42: #{qnetwork_forward.1} parent=1 // pred_check
      _
    $region43: #{qnetwork_forward.1} parent=1 // pred_check_branch
      %353 = sbr.rel (0) target = $region45
    $region44: #{qnetwork_forward.1} parent=1 // pred_region
      _
    $region45: #{qnetwork_forward.1} parent=1 // pred_fallthru
      _
    %354 = vsyncpa [#allocation3], 1
    %355 = vsyncpa [#allocation5], 1

</llo_original>
